<compile_context>
chip_gen: v5e
topology: v5e:2x2
jax: 0.10.0
libtpu: 0.0.40
codegen_flags: <defaults>
</compile_context>

<pallas_src>
import functools

import numpy as np
import jax
import jax.numpy as jnp
from jax.experimental import pallas as pl
from jax.experimental.pallas import tpu as pltpu

_D = 128                   # doppler / feature size fixed by the module
_MEGACORE_MIN_ROWS = 2048  # above this many rows, force >= 2 grid blocks (v7x 2 TCs)


def _make_block_weight_np():
    """Fused real-valued (256, 256) weight for the complex matmul.

    W[h, j] = exp(-1j*2*pi*j*hh/128), hh = (h+64) % 128 (nn.Linear: y = x @ W^T).
    With the kernel-side input packed as [xr | xi] along lanes, the fused weight
    [[Wr^T, Wi^T], [-Wi^T, Wr^T]] makes a single matmul produce [yr | yi].
    """
    h = np.arange(_D)
    hh = (h + 64) % _D
    j = np.arange(_D)
    phase = -2.0 * np.pi * np.outer(hh, j) / _D          # (out=h, in=j)
    wr = np.cos(phase).astype(np.float32)
    wi = np.sin(phase).astype(np.float32)
    wrt, wit = wr.T, wi.T                                # (in, out) = (128, 128)
    top = np.concatenate([wrt, wit], axis=1)             # (128, 256)
    bot = np.concatenate([-wit, wrt], axis=1)            # (128, 256)
    return np.concatenate([top, bot], axis=0)            # (256, 256) float32


_W_BLOCK_NP = _make_block_weight_np()   # built once; constant-folded under jit


def _doppler_kernel(xr_ref, xi_ref, w_ref, yr_ref, yi_ref):
    # Lane-aligned on-tile pack [xr | xi] (VMEM only, hidden under HBM DMA),
    # one fused (tm, 256) @ (256, 256) f32 MXU matmul, lane-aligned split of
    # [yr | yi] into the two 128-wide (unmasked, lane-dense) output stores.
    xp = jnp.concatenate([xr_ref[...], xi_ref[...]], axis=-1)
    out = jnp.dot(xp, w_ref[...], preferred_element_type=jnp.float32)
    yr_ref[...] = out[:, :_D]
    yi_ref[...] = out[:, _D:]


def _round_up(n, m):
    return ((n + m - 1) // m) * m


def _pick_tile(M, tm):
    # Clamp to the (8-aligned) problem size so small inputs are a single block.
    tm_eff = min(tm, _round_up(M, 8))
    if M >= _MEGACORE_MIN_ROWS:
        # Guarantee >= 2 blocks on the 'parallel' axis so both v7x TensorCores
        # get work; costs at most one extra ~0.35us grid step.
        tm_eff = min(tm_eff, _round_up((M + 1) // 2, 8))
    return max(tm_eff, 8)


@functools.partial(jax.jit, static_argnums=(2,))
def _forward(x_real, x_imag, tm):
    lead = x_real.shape[:-1]
    M = int(np.prod(lead)) if lead else 1

    xr = x_real.astype(jnp.float32).reshape(M, _D)   # free: trailing dim unchanged
    xi = x_imag.astype(jnp.float32).reshape(M, _D)
    w = jnp.asarray(_W_BLOCK_NP)                     # (256, 256) constant

    tm_eff = _pick_tile(M, tm)
    grid = (pl.cdiv(M, tm_eff),)   # partial last block handled by Pallas masking

    cost = pl.CostEstimate(
        flops=2 * M * (2 * _D) * (2 * _D),
        transcendentals=0,
        bytes_accessed=4 * M * _D * 4 + (2 * _D) * (2 * _D) * 4,
    )

    yr, yi = pl.pallas_call(
        _doppler_kernel,
        out_shape=(jax.ShapeDtypeStruct((M, _D), jnp.float32),
                   jax.ShapeDtypeStruct((M, _D), jnp.float32)),
        grid_spec=pltpu.PrefetchScalarGridSpec(
            num_scalar_prefetch=0,
            grid=grid,
            in_specs=[
                pl.BlockSpec((tm_eff, _D), lambda i: (i, 0)),
                pl.BlockSpec((tm_eff, _D), lambda i: (i, 0)),
                # constant block index -> weight DMA'd once, stays resident
                pl.BlockSpec((2 * _D, 2 * _D), lambda i: (0, 0)),
            ],
            out_specs=(
                pl.BlockSpec((tm_eff, _D), lambda i: (i, 0)),
                pl.BlockSpec((tm_eff, _D), lambda i: (i, 0)),
            ),
        ),
        compiler_params=pltpu.CompilerParams(
            dimension_semantics=("parallel",),
            vmem_limit_bytes=32 * 1024 * 1024),
        cost_estimate=cost,
    )(xr, xi, w)

    return yr.reshape(*lead, _D), yi.reshape(*lead, _D)


def doppler_fourier_net(x_real, x_imag, *, tm=2048):
    """Fixed complex DFT linear layer along the last axis (size 128).

    Native (cplxmodule-style) split interface: takes real/imag float arrays of
    identical shape (..., 128) and returns (y_real, y_imag) of the same shape.
    """
    assert x_real.shape == x_imag.shape, "real/imag shapes must match"
    assert x_real.shape[-1] == _D, "trailing (doppler) dim must be 128"
    return _forward(x_real, x_imag, tm)


def doppler_fourier_net_complex(x_complex, *, tm=2048):
    """Convenience wrapper for complex64 inputs (pays one split + one merge pass)."""
    assert x_complex.shape[-1] == _D, "trailing (doppler) dim must be 128"
    yr, yi = _forward(jnp.real(x_complex), jnp.imag(x_complex), tm)
    return jax.lax.complex(yr, yi).astype(jnp.complex64)


if __name__ == "__main__":
    key = jax.random.PRNGKey(0)
    kr, ki = jax.random.split(key)
    # Small radar-cube-like input: (batch=2, channels=4, range=16, doppler=128).
    B, C, R = 2, 4, 16
    xr = jax.random.normal(kr, (B, C, R, _D), dtype=jnp.float32)
    xi = jax.random.normal(ki, (B, C, R, _D), dtype=jnp.float32)

    yr, yi = doppler_fourier_net(xr, xi)
    yr, yi = jax.block_until_ready((yr, yi))

    # Reference check: plain JAX complex matmul, same math as CplxLinear.
    h = np.arange(_D)
    hh = (h + 64) % _D
    j = np.arange(_D)
    W = np.exp(-1j * 2.0 * np.pi * np.outer(hh, j) / _D).astype(np.complex64)  # (out, in)
    x = (xr + 1j * xi).astype(jnp.complex64)
    y_ref = jnp.einsum("bcrj,hj->bcrh", x, jnp.asarray(W))
    np.testing.assert_allclose(np.asarray(yr), np.asarray(jnp.real(y_ref)),
                               rtol=1e-4, atol=1e-3)
    np.testing.assert_allclose(np.asarray(yi), np.asarray(jnp.imag(y_ref)),
                               rtol=1e-4, atol=1e-3)

    # Also exercise the complex64 convenience path once.
    yc = jax.block_until_ready(doppler_fourier_net_complex(x))
    np.testing.assert_allclose(np.asarray(yc), np.asarray(y_ref),
                               rtol=1e-4, atol=1e-3)

    print("KERNEL_OK")
</pallas_src>

<mosaic_0001>
module attributes {stable_mosaic.version = 11 : i64} {
  func.func @_doppler_kernel(%arg0: i32, %arg1: memref<128x128xf32, #tpu.memory_space<vmem>>, %arg2: memref<128x128xf32, #tpu.memory_space<vmem>>, %arg3: memref<256x256xf32, #tpu.memory_space<vmem>>, %arg4: memref<128x128xf32, #tpu.memory_space<vmem>>, %arg5: memref<128x128xf32, #tpu.memory_space<vmem>>) attributes {dimension_semantics = [#tpu.dimension_semantics<parallel>], iteration_bounds = array<i64: 1>, scalar_prefetch = 0 : i64, scratch_operands = 0 : i64, tpu.core_type = #tpu.core_type<tc>, window_params = [{transform_indices = @transform_0, window_bounds = array<i64: 128, 128>}, {transform_indices = @transform_1, window_bounds = array<i64: 128, 128>}, {pipeline_mode = #tpu.pipeline_mode<synchronous>, transform_indices = @transform_2, window_bounds = array<i64: 256, 256>}, {transform_indices = @transform_3, window_bounds = array<i64: 128, 128>}, {transform_indices = @transform_4, window_bounds = array<i64: 128, 128>}]} {
    %c0 = arith.constant 0 : index
    %c0_0 = arith.constant 0 : index
    %0 = vector.load %arg1[%c0, %c0_0] : memref<128x128xf32, #tpu.memory_space<vmem>>, vector<128x128xf32>
    %c0_1 = arith.constant 0 : index
    %c0_2 = arith.constant 0 : index
    %1 = vector.load %arg2[%c0_1, %c0_2] : memref<128x128xf32, #tpu.memory_space<vmem>>, vector<128x128xf32>
    %2 = tpu.concatenate %0, %1 in 1 : vector<128x128xf32>, vector<128x128xf32> -> vector<128x256xf32>
    %c0_3 = arith.constant 0 : index
    %c0_4 = arith.constant 0 : index
    %3 = vector.load %arg3[%c0_3, %c0_4] : memref<256x256xf32, #tpu.memory_space<vmem>>, vector<256x256xf32>
    %cst = arith.constant dense<0.000000e+00> : vector<128x256xf32>
    %4 = tpu.matmul %2, %3, %cst {dimension_numbers = #tpu.dot_dimension_numbers<[1], [0], [0], [1], [0, 0, 1, 1], [], []>} : vector<128x256xf32>, vector<256x256xf32>, vector<128x256xf32> -> vector<128x256xf32>
    %5 = vector.extract_strided_slice %4 {offsets = [0, 0], sizes = [128, 128], strides = [1, 1]} : vector<128x256xf32> to vector<128x128xf32>
    %c0_5 = arith.constant 0 : index
    %c0_6 = arith.constant 0 : index
    %6 = vector.load %arg4[%c0_5, %c0_6] : memref<128x128xf32, #tpu.memory_space<vmem>>, vector<128x128xf32>
    tpu.vector_store %arg4[%c0_5, %c0_6], %5 {strides = array<i32>} : memref<128x128xf32, #tpu.memory_space<vmem>>, vector<128x128xf32>,
    %7 = vector.extract_strided_slice %4 {offsets = [0, 128], sizes = [128, 128], strides = [1, 1]} : vector<128x256xf32> to vector<128x128xf32>
    %c0_7 = arith.constant 0 : index
    %c0_8 = arith.constant 0 : index
    %8 = vector.load %arg5[%c0_7, %c0_8] : memref<128x128xf32, #tpu.memory_space<vmem>>, vector<128x128xf32>
    tpu.vector_store %arg5[%c0_7, %c0_8], %7 {strides = array<i32>} : memref<128x128xf32, #tpu.memory_space<vmem>>, vector<128x128xf32>,
    return
  }
  func.func @transform_0(%arg0: i32) -> (i32, i32) {
    %c0_i32 = arith.constant 0 : i32
    %c0_i32_0 = arith.constant 0 : i32
    return %arg0, %c0_i32 : i32, i32
  }
  func.func @transform_1(%arg0: i32) -> (i32, i32) {
    %c0_i32 = arith.constant 0 : i32
    %c0_i32_0 = arith.constant 0 : i32
    return %arg0, %c0_i32 : i32, i32
  }
  func.func @transform_2(%arg0: i32) -> (i32, i32) {
    %c0_i32 = arith.constant 0 : i32
    %c0_i32_0 = arith.constant 0 : i32
    %c0_i32_1 = arith.constant 0 : i32
    return %c0_i32, %c0_i32_0 : i32, i32
  }
  func.func @transform_3(%arg0: i32) -> (i32, i32) {
    %c0_i32 = arith.constant 0 : i32
    %c0_i32_0 = arith.constant 0 : i32
    return %arg0, %c0_i32 : i32, i32
  }
  func.func @transform_4(%arg0: i32) -> (i32, i32) {
    %c0_i32 = arith.constant 0 : i32
    %c0_i32_0 = arith.constant 0 : i32
    return %arg0, %c0_i32 : i32, i32
  }
}

</mosaic_0001>

<llo_original>
// kernel: _forward.1
$region0: #{_forward.1}
  #allocation0 [shape = 'u32[]', space=smem, size = 0x4, offset = 0x4, fixed_abs, tag = 'smem constant byte address 0x4 - core index']
  #allocation1 [shape = 'u32[72,128]{1,0:T(1,128)}', space=vmem, size = 0x9000, scoped, tag = 'internal scratch']
  %s0 = inlined_call_operand.hbm [shape: f32[128,128], index: 0, kind: input, shape index: {}]
  %s1 = inlined_call_operand.hbm [shape: f32[128,128], index: 1, kind: input, shape index: {}]
  %s2 = inlined_call_operand.hbm [shape: f32[256,256], index: 2, kind: input, shape index: {}]
  %s3 = inlined_call_operand.hbm [shape: f32[128,128], index: 3, kind: output, shape index: {0}]
  %s4 = inlined_call_operand.hbm [shape: f32[128,128], index: 4, kind: output, shape index: {1}]
  %5 = xla_tuple %s3, %s4
  %s6 = sld [smem:[#allocation0]]
  $region42: #{_forward.1} parent=0
    _
  %s8 = ssub.s32 1, %s6
  %s9 = scalar_select 0, %s8, %s6
  $region1: #{_forward.1} parent=0
    #allocation2 [shape = 'u8[65536]{0}', space=vmem, size = 0x10000, scoped, tag = 'input window, operand 0, single buffered']
    #allocation3 [shape = 's32[1]{0}', space=sflag, size = 0x4, scoped, tag = 'scoped memory for _forward.1']
    #allocation4 [shape = 's32[1]{0}', space=sflag, size = 0x4, scoped, tag = 'scoped memory for _forward.1']
    #allocation5 [shape = 'u8[65536]{0}', space=vmem, size = 0x10000, scoped, tag = 'input window, operand 1, single buffered']
    #allocation6 [shape = 's32[1]{0}', space=sflag, size = 0x4, scoped, tag = 'scoped memory for _forward.1']
    #allocation7 [shape = 'u8[262144]{0}', space=vmem, size = 0x40000, scoped, tag = 'input window, operand 2, single buffered']
    #allocation8 [shape = 'u8[65536]{0}', space=vmem, size = 0x10000, scoped, tag = 'output window, operand 0, single buffered']
    #allocation9 [shape = 'u8[65536]{0}', space=vmem, size = 0x10000, scoped, tag = 'output window, operand 1, single buffered']
    #allocation10 [shape = 's32[1]{0}', space=sflag, size = 0x4, scoped, tag = 'scoped memory for _forward.1']
    %10 = vsyncpa [#allocation3], 0
    %11 = vsyncpa [#allocation6], 0
    %12 = vsyncpa [#allocation4], 0
    %13 = vsyncpa [#allocation10], 0
    // Predicated region
    $region2: #{_forward.1} parent=1 // pred_check
      _
    $region3: #{_forward.1} parent=1 // pred_check_branch
      %15 = sbr.rel (0) target = $region5
    $region4: #{_forward.1} parent=1 // pred_region
      %17 = vsyncadd [#allocation3], 0
      %s18 = sshll.u32 %s0, 4
      %s19 = int_to_ptr.hbm [resolvable:$true] %s18
      %s20 = sshll.u32 [#allocation2], 4
      %s21 = int_to_ptr.vmem [resolvable:$true] %s20
      %26 = dma.hbm_to_vmem [thread:$0]  %s19, 2048, %s21, [#allocation3], 128, 128, 8
    $region5: #{_forward.1} parent=1 // pred_fallthru
      _
    // Predicated region
    $region6: #{_forward.1} parent=1 // pred_check
      _
    $region7: #{_forward.1} parent=1 // pred_check_branch
      %28 = sbr.rel (0) target = $region9
    $region8: #{_forward.1} parent=1 // pred_region
      %30 = vsyncadd [#allocation6], 0
      %s31 = sshll.u32 %s1, 4
      %s32 = int_to_ptr.hbm [resolvable:$true] %s31
      %s33 = sshll.u32 [#allocation5], 4
      %s34 = int_to_ptr.vmem [resolvable:$true] %s33
      %39 = dma.hbm_to_vmem [thread:$0]  %s32, 2048, %s34, [#allocation6], 128, 128, 8
    $region9: #{_forward.1} parent=1 // pred_fallthru
      _
    // Predicated region
    $region10: #{_forward.1} parent=1 // pred_check
      _
    $region11: #{_forward.1} parent=1 // pred_check_branch
      %41 = sbr.rel (0) target = $region13
    $region12: #{_forward.1} parent=1 // pred_region
      %43 = vsyncadd [#allocation6], 0
      %s44 = sshll.u32 %s2, 4
      %s45 = int_to_ptr.hbm [resolvable:$true] %s44
      %s46 = sshll.u32 [#allocation7], 4
      %s47 = int_to_ptr.vmem [resolvable:$true] %s46
      %52 = dma.hbm_to_vmem [thread:$0]  %s45, 8192, %s47, [#allocation6], 256, 256, 16
    $region13: #{_forward.1} parent=1 // pred_fallthru
      _
    // Predicated region
    $region14: #{_forward.1} parent=1 // pred_check
      _
    $region15: #{_forward.1} parent=1 // pred_check_branch
      %54 = sbr.rel (0) target = $region17
    $region16: #{_forward.1} parent=1 // pred_region
      %56 = dma.done [#allocation3], 2048
    $region17: #{_forward.1} parent=1 // pred_fallthru
      _
    // Predicated region
    $region18: #{_forward.1} parent=1 // pred_check
      _
    $region19: #{_forward.1} parent=1 // pred_check_branch
      %58 = sbr.rel (0) target = $region21
    $region20: #{_forward.1} parent=1 // pred_region
      %60 = dma.done [#allocation6], 2048
    $region21: #{_forward.1} parent=1 // pred_fallthru
      _
    // Predicated region
    $region22: #{_forward.1} parent=1 // pred_check
      _
    $region23: #{_forward.1} parent=1 // pred_check_branch
      %62 = sbr.rel (0) target = $region25
    $region24: #{_forward.1} parent=1 // pred_region
      %64 = dma.done [#allocation6], 8192
    $region25: #{_forward.1} parent=1 // pred_fallthru
      _
    %v65 = vld [vmem:[#allocation2] sm:$0xff]
    %v66 = vld [vmem:[#allocation2 + $0x8] sm:$0xff]
    %v67 = vld [vmem:[#allocation2 + $0x10] sm:$0xff]
    %v68 = vld [vmem:[#allocation2 + $0x18] sm:$0xff]
    %v69 = vld [vmem:[#allocation2 + $0x20] sm:$0xff]
    %v70 = vld [vmem:[#allocation2 + $0x28] sm:$0xff]
    %v71 = vld [vmem:[#allocation2 + $0x30] sm:$0xff]
    %v72 = vld [vmem:[#allocation2 + $0x38] sm:$0xff]
    %v73 = vld [vmem:[#allocation2 + $0x40] sm:$0xff]
    %v74 = vld [vmem:[#allocation2 + $0x48] sm:$0xff]
    %v75 = vld [vmem:[#allocation2 + $0x50] sm:$0xff]
    %v76 = vld [vmem:[#allocation2 + $0x58] sm:$0xff]
    %v77 = vld [vmem:[#allocation2 + $0x60] sm:$0xff]
    %v78 = vld [vmem:[#allocation2 + $0x68] sm:$0xff]
    %v79 = vld [vmem:[#allocation2 + $0x70] sm:$0xff]
    %v80 = vld [vmem:[#allocation2 + $0x78] sm:$0xff]
    %v81 = vld [vmem:[#allocation5] sm:$0xff]
    %v82 = vld [vmem:[#allocation5 + $0x8] sm:$0xff]
    %v83 = vld [vmem:[#allocation5 + $0x10] sm:$0xff]
    %v84 = vld [vmem:[#allocation5 + $0x18] sm:$0xff]
    %v85 = vld [vmem:[#allocation5 + $0x20] sm:$0xff]
    %v86 = vld [vmem:[#allocation5 + $0x28] sm:$0xff]
    %v87 = vld [vmem:[#allocation5 + $0x30] sm:$0xff]
    %v88 = vld [vmem:[#allocation5 + $0x38] sm:$0xff]
    %v89 = vld [vmem:[#allocation5 + $0x40] sm:$0xff]
    %v90 = vld [vmem:[#allocation5 + $0x48] sm:$0xff]
    %v91 = vld [vmem:[#allocation5 + $0x50] sm:$0xff]
    %v92 = vld [vmem:[#allocation5 + $0x58] sm:$0xff]
    %v93 = vld [vmem:[#allocation5 + $0x60] sm:$0xff]
    %v94 = vld [vmem:[#allocation5 + $0x68] sm:$0xff]
    %v95 = vld [vmem:[#allocation5 + $0x70] sm:$0xff]
    %v96 = vld [vmem:[#allocation5 + $0x78] sm:$0xff]
    %v97 = vld [vmem:[#allocation7] sm:$0xff]
    %v98 = vld [vmem:[#allocation7 + $0x8] sm:$0xff]
    %v99 = vld [vmem:[#allocation7 + $0x10] sm:$0xff]
    %v100 = vld [vmem:[#allocation7 + $0x18] sm:$0xff]
    %v101 = vld [vmem:[#allocation7 + $0x20] sm:$0xff]
    %v102 = vld [vmem:[#allocation7 + $0x28] sm:$0xff]
    %v103 = vld [vmem:[#allocation7 + $0x30] sm:$0xff]
    %v104 = vld [vmem:[#allocation7 + $0x38] sm:$0xff]
    %v105 = vld [vmem:[#allocation7 + $0x40] sm:$0xff]
    %v106 = vld [vmem:[#allocation7 + $0x48] sm:$0xff]
    %v107 = vld [vmem:[#allocation7 + $0x50] sm:$0xff]
    %v108 = vld [vmem:[#allocation7 + $0x58] sm:$0xff]
    %v109 = vld [vmem:[#allocation7 + $0x60] sm:$0xff]
    %v110 = vld [vmem:[#allocation7 + $0x68] sm:$0xff]
    %v111 = vld [vmem:[#allocation7 + $0x70] sm:$0xff]
    %v112 = vld [vmem:[#allocation7 + $0x78] sm:$0xff]
    %v113 = vld [vmem:[#allocation7 + $0x80] sm:$0xff]
    %v114 = vld [vmem:[#allocation7 + $0x88] sm:$0xff]
    %v115 = vld [vmem:[#allocation7 + $0x90] sm:$0xff]
    %v116 = vld [vmem:[#allocation7 + $0x98] sm:$0xff]
    %v117 = vld [vmem:[#allocation7 + $0xa0] sm:$0xff]
    %v118 = vld [vmem:[#allocation7 + $0xa8] sm:$0xff]
    %v119 = vld [vmem:[#allocation7 + $0xb0] sm:$0xff]
    %v120 = vld [vmem:[#allocation7 + $0xb8] sm:$0xff]
    %v121 = vld [vmem:[#allocation7 + $0xc0] sm:$0xff]
    %v122 = vld [vmem:[#allocation7 + $0xc8] sm:$0xff]
    %v123 = vld [vmem:[#allocation7 + $0xd0] sm:$0xff]
    %v124 = vld [vmem:[#allocation7 + $0xd8] sm:$0xff]
    %v125 = vld [vmem:[#allocation7 + $0xe0] sm:$0xff]
    %v126 = vld [vmem:[#allocation7 + $0xe8] sm:$0xff]
    %v127 = vld [vmem:[#allocation7 + $0xf0] sm:$0xff]
    %v128 = vld [vmem:[#allocation7 + $0xf8] sm:$0xff]
    %v129 = vld [vmem:[#allocation7 + $0x100] sm:$0xff]
    %v130 = vld [vmem:[#allocation7 + $0x108] sm:$0xff]
    %v131 = vld [vmem:[#allocation7 + $0x110] sm:$0xff]
    %v132 = vld [vmem:[#allocation7 + $0x118] sm:$0xff]
    %v133 = vld [vmem:[#allocation7 + $0x120] sm:$0xff]
    %v134 = vld [vmem:[#allocation7 + $0x128] sm:$0xff]
    %v135 = vld [vmem:[#allocation7 + $0x130] sm:$0xff]
    %v136 = vld [vmem:[#allocation7 + $0x138] sm:$0xff]
    %v137 = vld [vmem:[#allocation7 + $0x140] sm:$0xff]
    %v138 = vld [vmem:[#allocation7 + $0x148] sm:$0xff]
    %v139 = vld [vmem:[#allocation7 + $0x150] sm:$0xff]
    %v140 = vld [vmem:[#allocation7 + $0x158] sm:$0xff]
    %v141 = vld [vmem:[#allocation7 + $0x160] sm:$0xff]
    %v142 = vld [vmem:[#allocation7 + $0x168] sm:$0xff]
    %v143 = vld [vmem:[#allocation7 + $0x170] sm:$0xff]
    %v144 = vld [vmem:[#allocation7 + $0x178] sm:$0xff]
    %v145 = vld [vmem:[#allocation7 + $0x180] sm:$0xff]
    %v146 = vld [vmem:[#allocation7 + $0x188] sm:$0xff]
    %v147 = vld [vmem:[#allocation7 + $0x190] sm:$0xff]
    %v148 = vld [vmem:[#allocation7 + $0x198] sm:$0xff]
    %v149 = vld [vmem:[#allocation7 + $0x1a0] sm:$0xff]
    %v150 = vld [vmem:[#allocation7 + $0x1a8] sm:$0xff]
    %v151 = vld [vmem:[#allocation7 + $0x1b0] sm:$0xff]
    %v152 = vld [vmem:[#allocation7 + $0x1b8] sm:$0xff]
    %v153 = vld [vmem:[#allocation7 + $0x1c0] sm:$0xff]
    %v154 = vld [vmem:[#allocation7 + $0x1c8] sm:$0xff]
    %v155 = vld [vmem:[#allocation7 + $0x1d0] sm:$0xff]
    %v156 = vld [vmem:[#allocation7 + $0x1d8] sm:$0xff]
    %v157 = vld [vmem:[#allocation7 + $0x1e0] sm:$0xff]
    %v158 = vld [vmem:[#allocation7 + $0x1e8] sm:$0xff]
    %v159 = vld [vmem:[#allocation7 + $0x1f0] sm:$0xff]
    %v160 = vld [vmem:[#allocation7 + $0x1f8] sm:$0xff]
    %161 = vmatpush.msra.mxu0 %v127
    %162 = vmatpush.msra.mxu0 %v125
    %163 = vmatpush.msra.mxu0 %v123
    %164 = vmatpush.msra.mxu0 %v121
    %165 = vmatpush.msra.mxu0 %v119
    %166 = vmatpush.msra.mxu0 %v117
    %167 = vmatpush.msra.mxu0 %v115
    %168 = vmatpush.msra.mxu0 %v113
    %169 = vmatpush.msra.mxu0 %v111
    %170 = vmatpush.msra.mxu0 %v109
    %171 = vmatpush.msra.mxu0 %v107
    %172 = vmatpush.msra.mxu0 %v105
    %173 = vmatpush.msra.mxu0 %v103
    %174 = vmatpush.msra.mxu0 %v101
    %175 = vmatpush.msra.mxu0 %v99
    %176 = vmatpush.msra.mxu0 %v97
    %177 = vmatmul.f32.gmra.mxu0 %v65
    %v178 = vpop.f32.mrf.mxu0
    %v179 = vadd.f32 0.0, %v178
    %180 = vmatmul.f32.gmra.mxu0 %v66
    %v181 = vpop.f32.mrf.mxu0
    %v182 = vadd.f32 0.0, %v181
    %183 = vmatmul.f32.gmra.mxu0 %v67
    %v184 = vpop.f32.mrf.mxu0
    %v185 = vadd.f32 0.0, %v184
    %186 = vmatmul.f32.gmra.mxu0 %v68
    %v187 = vpop.f32.mrf.mxu0
    %v188 = vadd.f32 0.0, %v187
    %189 = vmatmul.f32.gmra.mxu0 %v69
    %v190 = vpop.f32.mrf.mxu0
    %v191 = vadd.f32 0.0, %v190
    %192 = vmatmul.f32.gmra.mxu0 %v70
    %v193 = vpop.f32.mrf.mxu0
    %v194 = vadd.f32 0.0, %v193
    %195 = vmatmul.f32.gmra.mxu0 %v71
    %v196 = vpop.f32.mrf.mxu0
    %v197 = vadd.f32 0.0, %v196
    %198 = vmatmul.f32.gmra.mxu0 %v72
    %v199 = vpop.f32.mrf.mxu0
    %v200 = vadd.f32 0.0, %v199
    %201 = vmatmul.f32.gmra.mxu0 %v73
    %v202 = vpop.f32.mrf.mxu0
    %v203 = vadd.f32 0.0, %v202
    %204 = vmatmul.f32.gmra.mxu0 %v74
    %v205 = vpop.f32.mrf.mxu0
    %v206 = vadd.f32 0.0, %v205
    %207 = vmatmul.f32.gmra.mxu0 %v75
    %v208 = vpop.f32.mrf.mxu0
    %v209 = vadd.f32 0.0, %v208
    %210 = vmatmul.f32.gmra.mxu0 %v76
    %v211 = vpop.f32.mrf.mxu0
    %v212 = vadd.f32 0.0, %v211
    %213 = vmatmul.f32.gmra.mxu0 %v77
    %v214 = vpop.f32.mrf.mxu0
    %v215 = vadd.f32 0.0, %v214
    %216 = vmatmul.f32.gmra.mxu0 %v78
    %v217 = vpop.f32.mrf.mxu0
    %v218 = vadd.f32 0.0, %v217
    %219 = vmatmul.f32.gmra.mxu0 %v79
    %v220 = vpop.f32.mrf.mxu0
    %v221 = vadd.f32 0.0, %v220
    %222 = vmatmul.f32.gmra.mxu0 %v80
    %v223 = vpop.f32.mrf.mxu0
    %v224 = vadd.f32 0.0, %v223
    %225 = vdwg.mxu0
    %226 = vmatpush.msra.mxu0 %v159
    %227 = vmatpush.msra.mxu0 %v157
    %228 = vmatpush.msra.mxu0 %v155
    %229 = vmatpush.msra.mxu0 %v153
    %230 = vmatpush.msra.mxu0 %v151
    %231 = vmatpush.msra.mxu0 %v149
    %232 = vmatpush.msra.mxu0 %v147
    %233 = vmatpush.msra.mxu0 %v145
    %234 = vmatpush.msra.mxu0 %v143
    %235 = vmatpush.msra.mxu0 %v141
    %236 = vmatpush.msra.mxu0 %v139
    %237 = vmatpush.msra.mxu0 %v137
    %238 = vmatpush.msra.mxu0 %v135
    %239 = vmatpush.msra.mxu0 %v133
    %240 = vmatpush.msra.mxu0 %v131
    %241 = vmatpush.msra.mxu0 %v129
    %242 = vmatmul.f32.gmra.mxu0 %v81
    %v243 = vpop.f32.mrf.mxu0
    %v244 = vadd.f32 %v179, %v243
    %245 = vmatmul.f32.gmra.mxu0 %v82
    %v246 = vpop.f32.mrf.mxu0
    %v247 = vadd.f32 %v182, %v246
    %248 = vmatmul.f32.gmra.mxu0 %v83
    %v249 = vpop.f32.mrf.mxu0
    %v250 = vadd.f32 %v185, %v249
    %251 = vmatmul.f32.gmra.mxu0 %v84
    %v252 = vpop.f32.mrf.mxu0
    %v253 = vadd.f32 %v188, %v252
    %254 = vmatmul.f32.gmra.mxu0 %v85
    %v255 = vpop.f32.mrf.mxu0
    %v256 = vadd.f32 %v191, %v255
    %257 = vmatmul.f32.gmra.mxu0 %v86
    %v258 = vpop.f32.mrf.mxu0
    %v259 = vadd.f32 %v194, %v258
    %260 = vmatmul.f32.gmra.mxu0 %v87
    %v261 = vpop.f32.mrf.mxu0
    %v262 = vadd.f32 %v197, %v261
    %263 = vmatmul.f32.gmra.mxu0 %v88
    %v264 = vpop.f32.mrf.mxu0
    %v265 = vadd.f32 %v200, %v264
    %266 = vmatmul.f32.gmra.mxu0 %v89
    %v267 = vpop.f32.mrf.mxu0
    %v268 = vadd.f32 %v203, %v267
    %269 = vmatmul.f32.gmra.mxu0 %v90
    %v270 = vpop.f32.mrf.mxu0
    %v271 = vadd.f32 %v206, %v270
    %272 = vmatmul.f32.gmra.mxu0 %v91
    %v273 = vpop.f32.mrf.mxu0
    %v274 = vadd.f32 %v209, %v273
    %275 = vmatmul.f32.gmra.mxu0 %v92
    %v276 = vpop.f32.mrf.mxu0
    %v277 = vadd.f32 %v212, %v276
    %278 = vmatmul.f32.gmra.mxu0 %v93
    %v279 = vpop.f32.mrf.mxu0
    %v280 = vadd.f32 %v215, %v279
    %281 = vmatmul.f32.gmra.mxu0 %v94
    %v282 = vpop.f32.mrf.mxu0
    %v283 = vadd.f32 %v218, %v282
    %284 = vmatmul.f32.gmra.mxu0 %v95
    %v285 = vpop.f32.mrf.mxu0
    %v286 = vadd.f32 %v221, %v285
    %287 = vmatmul.f32.gmra.mxu0 %v96
    %v288 = vpop.f32.mrf.mxu0
    %v289 = vadd.f32 %v224, %v288
    %290 = vdwg.mxu0
    %291 = vmatpush.msra.mxu0 %v128
    %292 = vmatpush.msra.mxu0 %v126
    %293 = vmatpush.msra.mxu0 %v124
    %294 = vmatpush.msra.mxu0 %v122
    %295 = vmatpush.msra.mxu0 %v120
    %296 = vmatpush.msra.mxu0 %v118
    %297 = vmatpush.msra.mxu0 %v116
    %298 = vmatpush.msra.mxu0 %v114
    %299 = vmatpush.msra.mxu0 %v112
    %300 = vmatpush.msra.mxu0 %v110
    %301 = vmatpush.msra.mxu0 %v108
    %302 = vmatpush.msra.mxu0 %v106
    %303 = vmatpush.msra.mxu0 %v104
    %304 = vmatpush.msra.mxu0 %v102
    %305 = vmatpush.msra.mxu0 %v100
    %306 = vmatpush.msra.mxu0 %v98
    %307 = vmatmul.f32.gmra.mxu0 %v65
    %v308 = vpop.f32.mrf.mxu0
    %v309 = vadd.f32 0.0, %v308
    %310 = vmatmul.f32.gmra.mxu0 %v66
    %v311 = vpop.f32.mrf.mxu0
    %v312 = vadd.f32 0.0, %v311
    %313 = vmatmul.f32.gmra.mxu0 %v67
    %v314 = vpop.f32.mrf.mxu0
    %v315 = vadd.f32 0.0, %v314
    %316 = vmatmul.f32.gmra.mxu0 %v68
    %v317 = vpop.f32.mrf.mxu0
    %v318 = vadd.f32 0.0, %v317
    %319 = vmatmul.f32.gmra.mxu0 %v69
    %v320 = vpop.f32.mrf.mxu0
    %v321 = vadd.f32 0.0, %v320
    %322 = vmatmul.f32.gmra.mxu0 %v70
    %v323 = vpop.f32.mrf.mxu0
    %v324 = vadd.f32 0.0, %v323
    %325 = vmatmul.f32.gmra.mxu0 %v71
    %v326 = vpop.f32.mrf.mxu0
    %v327 = vadd.f32 0.0, %v326
    %328 = vmatmul.f32.gmra.mxu0 %v72
    %v329 = vpop.f32.mrf.mxu0
    %v330 = vadd.f32 0.0, %v329
    %331 = vmatmul.f32.gmra.mxu0 %v73
    %v332 = vpop.f32.mrf.mxu0
    %v333 = vadd.f32 0.0, %v332
    %334 = vmatmul.f32.gmra.mxu0 %v74
    %v335 = vpop.f32.mrf.mxu0
    %v336 = vadd.f32 0.0, %v335
    %337 = vmatmul.f32.gmra.mxu0 %v75
    %v338 = vpop.f32.mrf.mxu0
    %v339 = vadd.f32 0.0, %v338
    %340 = vmatmul.f32.gmra.mxu0 %v76
    %v341 = vpop.f32.mrf.mxu0
    %v342 = vadd.f32 0.0, %v341
    %343 = vmatmul.f32.gmra.mxu0 %v77
    %v344 = vpop.f32.mrf.mxu0
    %v345 = vadd.f32 0.0, %v344
    %346 = vmatmul.f32.gmra.mxu0 %v78
    %v347 = vpop.f32.mrf.mxu0
    %v348 = vadd.f32 0.0, %v347
    %349 = vmatmul.f32.gmra.mxu0 %v79
    %v350 = vpop.f32.mrf.mxu0
    %v351 = vadd.f32 0.0, %v350
    %352 = vmatmul.f32.gmra.mxu0 %v80
    %v353 = vpop.f32.mrf.mxu0
    %v354 = vadd.f32 0.0, %v353
    %355 = vdwg.mxu0
    %356 = vmatpush.msra.mxu0 %v160
    %357 = vmatpush.msra.mxu0 %v158
    %358 = vmatpush.msra.mxu0 %v156
    %359 = vmatpush.msra.mxu0 %v154
    %360 = vmatpush.msra.mxu0 %v152
    %361 = vmatpush.msra.mxu0 %v150
    %362 = vmatpush.msra.mxu0 %v148
    %363 = vmatpush.msra.mxu0 %v146
    %364 = vmatpush.msra.mxu0 %v144
    %365 = vmatpush.msra.mxu0 %v142
    %366 = vmatpush.msra.mxu0 %v140
    %367 = vmatpush.msra.mxu0 %v138
    %368 = vmatpush.msra.mxu0 %v136
    %369 = vmatpush.msra.mxu0 %v134
    %370 = vmatpush.msra.mxu0 %v132
    %371 = vmatpush.msra.mxu0 %v130
    %372 = vmatmul.f32.gmra.mxu0 %v81
    %v373 = vpop.f32.mrf.mxu0
    %v374 = vadd.f32 %v309, %v373
    %375 = vmatmul.f32.gmra.mxu0 %v82
    %v376 = vpop.f32.mrf.mxu0
    %v377 = vadd.f32 %v312, %v376
    %378 = vmatmul.f32.gmra.mxu0 %v83
    %v379 = vpop.f32.mrf.mxu0
    %v380 = vadd.f32 %v315, %v379
    %381 = vmatmul.f32.gmra.mxu0 %v84
    %v382 = vpop.f32.mrf.mxu0
    %v383 = vadd.f32 %v318, %v382
    %384 = vmatmul.f32.gmra.mxu0 %v85
    %v385 = vpop.f32.mrf.mxu0
    %v386 = vadd.f32 %v321, %v385
    %387 = vmatmul.f32.gmra.mxu0 %v86
    %v388 = vpop.f32.mrf.mxu0
    %v389 = vadd.f32 %v324, %v388
    %390 = vmatmul.f32.gmra.mxu0 %v87
    %v391 = vpop.f32.mrf.mxu0
    %v392 = vadd.f32 %v327, %v391
    %393 = vmatmul.f32.gmra.mxu0 %v88
    %v394 = vpop.f32.mrf.mxu0
    %v395 = vadd.f32 %v330, %v394
    %396 = vmatmul.f32.gmra.mxu0 %v89
    %v397 = vpop.f32.mrf.mxu0
    %v398 = vadd.f32 %v333, %v397
    %399 = vmatmul.f32.gmra.mxu0 %v90
    %v400 = vpop.f32.mrf.mxu0
    %v401 = vadd.f32 %v336, %v400
    %402 = vmatmul.f32.gmra.mxu0 %v91
    %v403 = vpop.f32.mrf.mxu0
    %v404 = vadd.f32 %v339, %v403
    %405 = vmatmul.f32.gmra.mxu0 %v92
    %v406 = vpop.f32.mrf.mxu0
    %v407 = vadd.f32 %v342, %v406
    %408 = vmatmul.f32.gmra.mxu0 %v93
    %v409 = vpop.f32.mrf.mxu0
    %v410 = vadd.f32 %v345, %v409
    %411 = vmatmul.f32.gmra.mxu0 %v94
    %v412 = vpop.f32.mrf.mxu0
    %v413 = vadd.f32 %v348, %v412
    %414 = vmatmul.f32.gmra.mxu0 %v95
    %v415 = vpop.f32.mrf.mxu0
    %v416 = vadd.f32 %v351, %v415
    %417 = vmatmul.f32.gmra.mxu0 %v96
    %v418 = vpop.f32.mrf.mxu0
    %v419 = vadd.f32 %v354, %v418
    %420 = vdwg.mxu0
    %421 = vst [vmem:[#allocation8] sm:$0xff] %v244
    %422 = vst [vmem:[#allocation8 + $0x8] sm:$0xff] %v247
    %423 = vst [vmem:[#allocation8 + $0x10] sm:$0xff] %v250
    %424 = vst [vmem:[#allocation8 + $0x18] sm:$0xff] %v253
    %425 = vst [vmem:[#allocation8 + $0x20] sm:$0xff] %v256
    %426 = vst [vmem:[#allocation8 + $0x28] sm:$0xff] %v259
    %427 = vst [vmem:[#allocation8 + $0x30] sm:$0xff] %v262
    %428 = vst [vmem:[#allocation8 + $0x38] sm:$0xff] %v265
    %429 = vst [vmem:[#allocation8 + $0x40] sm:$0xff] %v268
    %430 = vst [vmem:[#allocation8 + $0x48] sm:$0xff] %v271
    %431 = vst [vmem:[#allocation8 + $0x50] sm:$0xff] %v274
    %432 = vst [vmem:[#allocation8 + $0x58] sm:$0xff] %v277
    %433 = vst [vmem:[#allocation8 + $0x60] sm:$0xff] %v280
    %434 = vst [vmem:[#allocation8 + $0x68] sm:$0xff] %v283
    %435 = vst [vmem:[#allocation8 + $0x70] sm:$0xff] %v286
    %436 = vst [vmem:[#allocation8 + $0x78] sm:$0xff] %v289
    %437 = vst [vmem:[#allocation9] sm:$0xff] %v374
    %438 = vst [vmem:[#allocation9 + $0x8] sm:$0xff] %v377
    %439 = vst [vmem:[#allocation9 + $0x10] sm:$0xff] %v380
    %440 = vst [vmem:[#allocation9 + $0x18] sm:$0xff] %v383
    %441 = vst [vmem:[#allocation9 + $0x20] sm:$0xff] %v386
    %442 = vst [vmem:[#allocation9 + $0x28] sm:$0xff] %v389
    %443 = vst [vmem:[#allocation9 + $0x30] sm:$0xff] %v392
    %444 = vst [vmem:[#allocation9 + $0x38] sm:$0xff] %v395
    %445 = vst [vmem:[#allocation9 + $0x40] sm:$0xff] %v398
    %446 = vst [vmem:[#allocation9 + $0x48] sm:$0xff] %v401
    %447 = vst [vmem:[#allocation9 + $0x50] sm:$0xff] %v404
    %448 = vst [vmem:[#allocation9 + $0x58] sm:$0xff] %v407
    %449 = vst [vmem:[#allocation9 + $0x60] sm:$0xff] %v410
    %450 = vst [vmem:[#allocation9 + $0x68] sm:$0xff] %v413
    %451 = vst [vmem:[#allocation9 + $0x70] sm:$0xff] %v416
    %452 = vst [vmem:[#allocation9 + $0x78] sm:$0xff] %v419
    // Predicated region
    $region26: #{_forward.1} parent=1 // pred_check
      _
    $region27: #{_forward.1} parent=1 // pred_check_branch
      %454 = sbr.rel (0) target = $region29
    $region28: #{_forward.1} parent=1 // pred_region
      %456 = vsyncadd [#allocation4], 0
      %s457 = sshll.u32 [#allocation8], 4
      %s458 = int_to_ptr.vmem [resolvable:$true] %s457
      %s459 = sshll.u32 %s3, 4
      %s460 = int_to_ptr.hbm [resolvable:$true] %s459
      %465 = dma.vmem_to_hbm [thread:$0]  %s458, 2048, %s460, [#allocation4], 128, 128, 8
    $region29: #{_forward.1} parent=1 // pred_fallthru
      _
    // Predicated region
    $region30: #{_forward.1} parent=1 // pred_check
      _
    $region31: #{_forward.1} parent=1 // pred_check_branch
      %467 = sbr.rel (0) target = $region33
    $region32: #{_forward.1} parent=1 // pred_region
      %469 = vsyncadd [#allocation10], 0
      %s470 = sshll.u32 [#allocation9], 4
      %s471 = int_to_ptr.vmem [resolvable:$true] %s470
      %s472 = sshll.u32 %s4, 4
      %s473 = int_to_ptr.hbm [resolvable:$true] %s472
      %478 = dma.vmem_to_hbm [thread:$0]  %s471, 2048, %s473, [#allocation10], 128, 128, 8
    $region33: #{_forward.1} parent=1 // pred_fallthru
      _
    // Predicated region
    $region34: #{_forward.1} parent=1 // pred_check
      _
    $region35: #{_forward.1} parent=1 // pred_check_branch
      %480 = sbr.rel (0) target = $region37
    $region36: #{_forward.1} parent=1 // pred_region
      %482 = dma.done [#allocation4], 2048
    $region37: #{_forward.1} parent=1 // pred_fallthru
      _
    // Predicated region
    $region38: #{_forward.1} parent=1 // pred_check
      _
    $region39: #{_forward.1} parent=1 // pred_check_branch
      %484 = sbr.rel (0) target = $region41
    $region40: #{_forward.1} parent=1 // pred_region
      %486 = dma.done [#allocation10], 2048
    $region41: #{_forward.1} parent=1 // pred_fallthru
      _
    %487 = vsyncpa [#allocation3], 1
    %488 = vsyncpa [#allocation6], 1
    %489 = vsyncpa [#allocation4], 1
    %490 = vsyncpa [#allocation10], 1

</llo_original>
